<compile_context>
chip_gen: v6e
topology: v6e:2x2x1
jax: 0.10.0
libtpu: 0.0.40
codegen_flags: <defaults>
</compile_context>

<pallas_src>
import math
from functools import partial
from itertools import combinations

import jax
import jax.numpy as jnp
from jax import lax
from jax.experimental import pallas as pl
from jax.experimental.pallas import tpu as pltpu


def _round_up(x, m):
    return (x + m - 1) // m * m


def _iso_gram_kernel(k_ref, xr_ref, xc_ref, w_ref,
                     est_ref, real_ref, sse_ref, *, batch_size):
    """Fused embed + all-pairs latent/real distances + masked SSE partials.

    k_ref   : SMEM (1,)         K parameter
    xr_ref  : (TB, D_in)        row tile of the (padded) batch
    xc_ref  : (TB, D_in)        col tile of the (padded) batch
    w_ref   : (D_in, D_emb)     embedding weight (resident across the grid)
    est_ref : (TB, TB)          latent (embedding-space) distance block
    real_ref: (TB, TB)          real (input-space metric) distance block
    sse_ref : (8, 128)          per-tile partial sum of squared errors
    """
    i = pl.program_id(0)
    j = pl.program_id(1)
    tb = xr_ref.shape[0]
    d_in = xr_ref.shape[1]
    d_emb = w_ref.shape[1]

    xr = xr_ref[...]                    # (TB, D_in)
    xc = xc_ref[...]                    # (TB, D_in)
    w = w_ref[...]                      # (D_in, D_emb)

    # Linear embedding of each tile: one matmul per tile, not per pair.
    er = jnp.dot(xr, w, preferred_element_type=jnp.float32)    # (TB, D_emb)
    ec = jnp.dot(xc, w, preferred_element_type=jnp.float32)    # (TB, D_emb)

    # Row-side squared norms (lane-axis reduce, broadcasts along lanes).
    xr2 = jnp.sum(xr * xr, axis=-1, keepdims=True)             # (TB, 1)
    er2 = jnp.sum(er * er, axis=-1, keepdims=True)             # (TB, 1)

    # Column-side squared norms as a (1, TB) row via a tiny MXU matmul,
    # avoiding an XLU transpose of a (TB, 1) column.
    contract_last = (((1,), (1,)), ((), ()))
    ones_in = jnp.ones((1, d_in), jnp.float32)
    ones_emb = jnp.ones((1, d_emb), jnp.float32)
    xc2 = lax.dot_general(ones_in, xc * xc, contract_last,
                          preferred_element_type=jnp.float32)  # (1, TB)
    ec2 = lax.dot_general(ones_emb, ec * ec, contract_last,
                          preferred_element_type=jnp.float32)  # (1, TB)

    # Cross terms on the MXU, contracting the feature axis of both operands
    # (no explicit transpose of the second operand).
    xxT = lax.dot_general(xr, xc, contract_last,
                          preferred_element_type=jnp.float32)  # (TB, TB)
    eeT = lax.dot_general(er, ec, contract_last,
                          preferred_element_type=jnp.float32)  # (TB, TB)

    # Gram-trick distances (clamp to 0 against f32 cancellation).
    real = jnp.sqrt(jnp.maximum(xr2 + xc2 - 2.0 * xxT, 0.0))   # (TB, TB)
    est = jnp.sqrt(jnp.maximum(er2 + ec2 - 2.0 * eeT, 0.0))    # (TB, TB)

    est_ref[...] = est
    real_ref[...] = real

    # Masked partial sum of squared errors for the MSE loss: only pairs with
    # global_row < global_col < batch_size (upper triangle, unpadded) count.
    row_g = i * tb + lax.broadcasted_iota(jnp.int32, (tb, tb), 0)
    col_g = j * tb + lax.broadcasted_iota(jnp.int32, (tb, tb), 1)
    valid = (row_g < col_g) & (col_g < batch_size)
    k = k_ref[0]
    err = k * est - real
    sse = jnp.sum(jnp.where(valid, err * err, 0.0))

    # Each grid step writes its own lane-dense (8, 128) block (scalar at
    # [0, 0], zeros elsewhere) -> no revisited output, both axes "parallel".
    r8 = lax.broadcasted_iota(jnp.int32, (8, 128), 0)
    c128 = lax.broadcasted_iota(jnp.int32, (8, 128), 1)
    sse_ref[...] = jnp.where((r8 == 0) & (c128 == 0), sse, 0.0)


def isometric_all_pairs(k, x, w, *, tile_b=256):
    """Fused all-pairs isometric-embedding forward.

    Returns (loss, est_mat, real_mat):
      loss     : scalar MSE over all C(B, 2) pairs of (K * latent_dist, real_dist)
      est_mat  : (B, B) latent (embedding-space) distance matrix
      real_mat : (B, B) input-space (euclidean metric) distance matrix
    """
    B, d_in = x.shape
    d_emb = w.shape[1]

    x = x.astype(jnp.float32)
    w = w.astype(jnp.float32)
    k = jnp.asarray(k, jnp.float32).reshape((1,))

    # Tile size: single full tile for small B, else 256 (multiple of 8 & 128).
    # tile_b can be lowered (e.g. 128) if VMEM is tight (v7x has 64 MiB/TC).
    if B <= tile_b:
        tb = _round_up(max(B, 1), 8)
    else:
        tb = tile_b
    b_pad = _round_up(B, tb)
    n_t = b_pad // tb

    if b_pad != B:
        x_p = jnp.zeros((b_pad, d_in), jnp.float32).at[:B].set(x)
    else:
        x_p = x

    kernel = partial(_iso_gram_kernel, batch_size=B)

    est_mat, real_mat, sse = pl.pallas_call(
        kernel,
        out_shape=(
            jax.ShapeDtypeStruct((b_pad, b_pad), jnp.float32),
            jax.ShapeDtypeStruct((b_pad, b_pad), jnp.float32),
            jax.ShapeDtypeStruct((8 * n_t, 128 * n_t), jnp.float32),
        ),
        grid=(n_t, n_t),
        in_specs=[
            pl.BlockSpec(memory_space=pltpu.MemorySpace.SMEM),   # K scalar
            pl.BlockSpec((tb, d_in), lambda i, j: (i, 0)),       # row tile
            pl.BlockSpec((tb, d_in), lambda i, j: (j, 0)),       # col tile
            pl.BlockSpec((d_in, d_emb), lambda i, j: (0, 0)),    # W resident
        ],
        out_specs=(
            pl.BlockSpec((tb, tb), lambda i, j: (i, j)),         # est block
            pl.BlockSpec((tb, tb), lambda i, j: (i, j)),         # real block
            pl.BlockSpec((8, 128), lambda i, j: (i, j)),         # SSE partial
        ),
        compiler_params=pltpu.CompilerParams(
            dimension_semantics=("parallel", "parallel")),
    )(k, x_p, x_p, w)

    num_pairs = B * (B - 1) // 2
    loss = jnp.sum(sse) * (1.0 / num_pairs)
    return loss, est_mat[:B, :B], real_mat[:B, :B]


class IsometricEmbedding:
    """JAX/Pallas mirror of the PyTorch IsometricEmbedding module.

    EmbeddingSpace := linear embedding (x @ W) with euclidean latent distance.
    Metric         := euclidean distance in input space.
    """

    def __init__(self, d_in, d_emb, key, proportional=False):
        self.W = (jax.random.normal(key, (d_in, d_emb), jnp.float32)
                  / math.sqrt(d_in))
        # K = Parameter(torch.ones(1), requires_grad=proportional)
        self.K = jnp.ones((1,), jnp.float32)
        self.proportional = proportional

    def forward(self, input):
        # Matches the PyTorch module exactly: forward returns None.
        return None

    def embed(self, x):
        return x @ self.W

    def train_batch_loss(self, batch):
        """Forward part of _train_batch: fused loss + per-pair distances."""
        bs = batch.shape[0]
        I, J = [list(idx) for idx in zip(*list(combinations(range(bs), 2)))]
        loss, est_mat, real_mat = isometric_all_pairs(self.K, batch, self.W)
        idx_i = jnp.asarray(I)
        idx_j = jnp.asarray(J)
        est = est_mat[idx_i, idx_j]
        real = real_mat[idx_i, idx_j]
        return loss, est, real
        # TODO(synk): loss.backward() / optim.step() (training-side autodiff +
        # optimizer) are intentionally not part of this forward kernel.


if __name__ == "__main__":
    key = jax.random.PRNGKey(0)
    k_w, k_x = jax.random.split(key)

    B, D_IN, D_EMB = 8, 32, 16          # batch=8 -> C(8,2)=28 pairs
    model = IsometricEmbedding(D_IN, D_EMB, k_w, proportional=False)
    batch = jax.random.normal(k_x, (B, D_IN), jnp.float32)

    loss, est, real = model.train_batch_loss(batch)
    loss = jax.block_until_ready(loss)
    est = jax.block_until_ready(est)
    real = jax.block_until_ready(real)

    # Pure-JAX reference check of the fused kernel.
    I, J = [list(idx) for idx in zip(*list(combinations(range(B), 2)))]
    xi, xj = batch[jnp.asarray(I)], batch[jnp.asarray(J)]
    est_ref = jnp.linalg.norm(xi @ model.W - xj @ model.W, axis=-1)
    real_ref = jnp.linalg.norm(xi - xj, axis=-1)
    loss_ref = jnp.mean((model.K[0] * est_ref - real_ref) ** 2)

    assert jnp.allclose(est, est_ref, rtol=1e-4, atol=1e-4)
    assert jnp.allclose(real, real_ref, rtol=1e-4, atol=1e-4)
    assert jnp.allclose(loss, loss_ref, rtol=1e-4, atol=1e-4)

    print("KERNEL_OK")
</pallas_src>

<mosaic_0001>
module attributes {stable_mosaic.version = 11 : i64} {
  func.func @_iso_gram_kernel(%arg0: i32, %arg1: i32, %arg2: memref<1xf32, #tpu.memory_space<smem>>, %arg3: memref<8x32xf32, #tpu.memory_space<vmem>>, %arg4: memref<8x32xf32, #tpu.memory_space<vmem>>, %arg5: memref<32x16xf32, #tpu.memory_space<vmem>>, %arg6: memref<8x8xf32, #tpu.memory_space<vmem>>, %arg7: memref<8x8xf32, #tpu.memory_space<vmem>>, %arg8: memref<8x128xf32, #tpu.memory_space<vmem>>) attributes {dimension_semantics = [#tpu.dimension_semantics<parallel>, #tpu.dimension_semantics<parallel>], iteration_bounds = array<i64: 1, 1>, scalar_prefetch = 0 : i64, scratch_operands = 0 : i64, tpu.core_type = #tpu.core_type<tc>, window_params = [{transform_indices = @transform_0, window_bounds = array<i64: 1>}, {transform_indices = @transform_1, window_bounds = array<i64: 8, 32>}, {transform_indices = @transform_2, window_bounds = array<i64: 8, 32>}, {pipeline_mode = #tpu.pipeline_mode<synchronous>, transform_indices = @transform_3, window_bounds = array<i64: 32, 16>}, {transform_indices = @transform_4, window_bounds = array<i64: 8, 8>}, {transform_indices = @transform_5, window_bounds = array<i64: 8, 8>}, {transform_indices = @transform_6, window_bounds = array<i64: 8, 128>}]} {
    %c0 = arith.constant 0 : index
    %c0_0 = arith.constant 0 : index
    %0 = vector.load %arg3[%c0, %c0_0] : memref<8x32xf32, #tpu.memory_space<vmem>>, vector<8x32xf32>
    %c0_1 = arith.constant 0 : index
    %c0_2 = arith.constant 0 : index
    %1 = vector.load %arg4[%c0_1, %c0_2] : memref<8x32xf32, #tpu.memory_space<vmem>>, vector<8x32xf32>
    %c0_3 = arith.constant 0 : index
    %c0_4 = arith.constant 0 : index
    %2 = vector.load %arg5[%c0_3, %c0_4] : memref<32x16xf32, #tpu.memory_space<vmem>>, vector<32x16xf32>
    %cst = arith.constant dense<0.000000e+00> : vector<8x16xf32>
    %3 = tpu.matmul %0, %2, %cst {dimension_numbers = #tpu.dot_dimension_numbers<[1], [0], [0], [1], [0, 0, 1, 1], [], []>} : vector<8x32xf32>, vector<32x16xf32>, vector<8x16xf32> -> vector<8x16xf32>
    %cst_5 = arith.constant dense<0.000000e+00> : vector<8x16xf32>
    %4 = tpu.matmul %1, %2, %cst_5 {dimension_numbers = #tpu.dot_dimension_numbers<[1], [0], [0], [1], [0, 0, 1, 1], [], []>} : vector<8x32xf32>, vector<32x16xf32>, vector<8x16xf32> -> vector<8x16xf32>
    %5 = arith.mulf %0, %0 : vector<8x32xf32>
    %cst_6 = arith.constant dense<0.000000e+00> : vector<8xf32>
    %6 = vector.multi_reduction <add>, %5, %cst_6 [1] : vector<8x32xf32> to vector<8xf32>
    %7 = vector.shape_cast %6 : vector<8xf32> to vector<8x1xf32>
    %8 = arith.mulf %3, %3 : vector<8x16xf32>
    %cst_7 = arith.constant dense<0.000000e+00> : vector<8xf32>
    %9 = vector.multi_reduction <add>, %8, %cst_7 [1] : vector<8x16xf32> to vector<8xf32>
    %10 = vector.shape_cast %9 : vector<8xf32> to vector<8x1xf32>
    %cst_8 = arith.constant 1.000000e+00 : f32
    %11 = vector.broadcast %cst_8 : f32 to vector<1x32xf32>
    %cst_9 = arith.constant 1.000000e+00 : f32
    %12 = vector.broadcast %cst_9 : f32 to vector<1x16xf32>
    %13 = arith.mulf %1, %1 : vector<8x32xf32>
    %cst_10 = arith.constant dense<0.000000e+00> : vector<1x8xf32>
    %14 = tpu.matmul %11, %13, %cst_10 {dimension_numbers = #tpu.dot_dimension_numbers<[1], [1], [0], [0], [0, 0, 1, 0], [], []>} : vector<1x32xf32>, vector<8x32xf32>, vector<1x8xf32> -> vector<1x8xf32>
    %15 = arith.mulf %4, %4 : vector<8x16xf32>
    %cst_11 = arith.constant dense<0.000000e+00> : vector<1x8xf32>
    %16 = tpu.matmul %12, %15, %cst_11 {dimension_numbers = #tpu.dot_dimension_numbers<[1], [1], [0], [0], [0, 0, 1, 0], [], []>} : vector<1x16xf32>, vector<8x16xf32>, vector<1x8xf32> -> vector<1x8xf32>
    %cst_12 = arith.constant dense<0.000000e+00> : vector<8x8xf32>
    %17 = tpu.matmul %0, %1, %cst_12 {dimension_numbers = #tpu.dot_dimension_numbers<[1], [1], [0], [0], [0, 0, 1, 0], [], []>} : vector<8x32xf32>, vector<8x32xf32>, vector<8x8xf32> -> vector<8x8xf32>
    %cst_13 = arith.constant dense<0.000000e+00> : vector<8x8xf32>
    %18 = tpu.matmul %3, %4, %cst_13 {dimension_numbers = #tpu.dot_dimension_numbers<[1], [1], [0], [0], [0, 0, 1, 0], [], []>} : vector<8x16xf32>, vector<8x16xf32>, vector<8x8xf32> -> vector<8x8xf32>
    %19 = vector.broadcast %7 : vector<8x1xf32> to vector<8x8xf32>
    %20 = vector.broadcast %14 : vector<1x8xf32> to vector<8x8xf32>
    %21 = arith.addf %19, %20 : vector<8x8xf32>
    %cst_14 = arith.constant 2.000000e+00 : f32
    %22 = vector.broadcast %cst_14 : f32 to vector<8x8xf32>
    %23 = arith.mulf %22, %17 : vector<8x8xf32>
    %24 = arith.subf %21, %23 : vector<8x8xf32>
    %cst_15 = arith.constant 0.000000e+00 : f32
    %25 = vector.broadcast %cst_15 : f32 to vector<8x8xf32>
    %26 = arith.maximumf %24, %25 : vector<8x8xf32>
    %27 = math.sqrt %26 : vector<8x8xf32>
    %28 = vector.broadcast %10 : vector<8x1xf32> to vector<8x8xf32>
    %29 = vector.broadcast %16 : vector<1x8xf32> to vector<8x8xf32>
    %30 = arith.addf %28, %29 : vector<8x8xf32>
    %cst_16 = arith.constant 2.000000e+00 : f32
    %31 = vector.broadcast %cst_16 : f32 to vector<8x8xf32>
    %32 = arith.mulf %31, %18 : vector<8x8xf32>
    %33 = arith.subf %30, %32 : vector<8x8xf32>
    %cst_17 = arith.constant 0.000000e+00 : f32
    %34 = vector.broadcast %cst_17 : f32 to vector<8x8xf32>
    %35 = arith.maximumf %33, %34 : vector<8x8xf32>
    %36 = math.sqrt %35 : vector<8x8xf32>
    %c0_18 = arith.constant 0 : index
    %c0_19 = arith.constant 0 : index
    %37 = vector.load %arg6[%c0_18, %c0_19] : memref<8x8xf32, #tpu.memory_space<vmem>>, vector<8x8xf32>
    tpu.vector_store %arg6[%c0_18, %c0_19], %36 {strides = array<i32>} : memref<8x8xf32, #tpu.memory_space<vmem>>, vector<8x8xf32>,
    %c0_20 = arith.constant 0 : index
    %c0_21 = arith.constant 0 : index
    %38 = vector.load %arg7[%c0_20, %c0_21] : memref<8x8xf32, #tpu.memory_space<vmem>>, vector<8x8xf32>
    tpu.vector_store %arg7[%c0_20, %c0_21], %27 {strides = array<i32>} : memref<8x8xf32, #tpu.memory_space<vmem>>, vector<8x8xf32>,
    %c8_i32 = arith.constant 8 : i32
    %39 = arith.muli %arg0, %c8_i32 : i32
    %40 = tpu.iota {dimensions = array<i32: 0>} : vector<8x8xi32>
    %41 = vector.broadcast %39 : i32 to vector<8x8xi32>
    %42 = arith.addi %41, %40 : vector<8x8xi32>
    %c8_i32_22 = arith.constant 8 : i32
    %43 = arith.muli %arg1, %c8_i32_22 : i32
    %44 = tpu.iota {dimensions = array<i32: 1>} : vector<8x8xi32>
    %45 = vector.broadcast %43 : i32 to vector<8x8xi32>
    %46 = arith.addi %45, %44 : vector<8x8xi32>
    %47 = arith.cmpi slt, %42, %46 : vector<8x8xi32>
    %c8_i32_23 = arith.constant 8 : i32
    %48 = vector.broadcast %c8_i32_23 : i32 to vector<8x8xi32>
    %49 = arith.cmpi slt, %46, %48 : vector<8x8xi32>
    %50 = arith.andi %47, %49 : vector<8x8xi1>
    %c0_24 = arith.constant 0 : index
    %51 = memref.load %arg2[%c0_24] : memref<1xf32, #tpu.memory_space<smem>>
    %52 = vector.broadcast %51 : f32 to vector<8x8xf32>
    %53 = arith.mulf %52, %36 : vector<8x8xf32>
    %54 = arith.subf %53, %27 : vector<8x8xf32>
    %55 = arith.mulf %54, %54 : vector<8x8xf32>
    %cst_25 = arith.constant 0.000000e+00 : f32
    %56 = vector.broadcast %cst_25 : f32 to vector<8x8xf32>
    %57 = arith.select %50, %55, %56 : vector<8x8xi1>, vector<8x8xf32>
    %58 = vector.shape_cast %57 : vector<8x8xf32> to vector<1x8x8xf32>
    %cst_26 = arith.constant dense<0.000000e+00> : vector<1xf32>
    %59 = vector.multi_reduction <add>, %58, %cst_26 [1, 2] : vector<1x8x8xf32> to vector<1xf32>
    %60 = vector.shape_cast %59 : vector<1xf32> to vector<1x1x1xf32>
    %61 = vector.extract %60[0, 0, 0] : f32 from vector<1x1x1xf32>
    %62 = tpu.iota {dimensions = array<i32: 0>} : vector<8x128xi32>
    %63 = tpu.iota {dimensions = array<i32: 1>} : vector<8x128xi32>
    %c0_i32 = arith.constant 0 : i32
    %64 = vector.broadcast %c0_i32 : i32 to vector<8x128xi32>
    %65 = arith.cmpi eq, %62, %64 : vector<8x128xi32>
    %c0_i32_27 = arith.constant 0 : i32
    %66 = vector.broadcast %c0_i32_27 : i32 to vector<8x128xi32>
    %67 = arith.cmpi eq, %63, %66 : vector<8x128xi32>
    %68 = arith.andi %65, %67 : vector<8x128xi1>
    %cst_28 = arith.constant 0.000000e+00 : f32
    %69 = vector.broadcast %61 : f32 to vector<8x128xf32>
    %70 = vector.broadcast %cst_28 : f32 to vector<8x128xf32>
    %71 = arith.select %68, %69, %70 : vector<8x128xi1>, vector<8x128xf32>
    %c0_29 = arith.constant 0 : index
    %c0_30 = arith.constant 0 : index
    %72 = vector.load %arg8[%c0_29, %c0_30] : memref<8x128xf32, #tpu.memory_space<vmem>>, vector<8x128xf32>
    tpu.vector_store %arg8[%c0_29, %c0_30], %71 {strides = array<i32>} : memref<8x128xf32, #tpu.memory_space<vmem>>, vector<8x128xf32>,
    return
  }
  func.func @transform_0(%arg0: i32, %arg1: i32) -> i32 {
    %c0_i32 = arith.constant 0 : i32
    %c0_i32_0 = arith.constant 0 : i32
    return %c0_i32 : i32
  }
  func.func @transform_1(%arg0: i32, %arg1: i32) -> (i32, i32) {
    %c0_i32 = arith.constant 0 : i32
    %c0_i32_0 = arith.constant 0 : i32
    return %arg0, %c0_i32 : i32, i32
  }
  func.func @transform_2(%arg0: i32, %arg1: i32) -> (i32, i32) {
    %c0_i32 = arith.constant 0 : i32
    %c0_i32_0 = arith.constant 0 : i32
    return %arg1, %c0_i32 : i32, i32
  }
  func.func @transform_3(%arg0: i32, %arg1: i32) -> (i32, i32) {
    %c0_i32 = arith.constant 0 : i32
    %c0_i32_0 = arith.constant 0 : i32
    %c0_i32_1 = arith.constant 0 : i32
    return %c0_i32, %c0_i32_0 : i32, i32
  }
  func.func @transform_4(%arg0: i32, %arg1: i32) -> (i32, i32) {
    %c0_i32 = arith.constant 0 : i32
    return %arg0, %arg1 : i32, i32
  }
  func.func @transform_5(%arg0: i32, %arg1: i32) -> (i32, i32) {
    %c0_i32 = arith.constant 0 : i32
    return %arg0, %arg1 : i32, i32
  }
  func.func @transform_6(%arg0: i32, %arg1: i32) -> (i32, i32) {
    %c0_i32 = arith.constant 0 : i32
    return %arg0, %arg1 : i32, i32
  }
}

</mosaic_0001>

<llo_original>
// kernel: tpu_custom_call.1
$region0: #{tpu_custom_call.1}
  #allocation0 [shape = 'u32[]', space=smem, size = 0x4, offset = 0x4, fixed_abs, tag = 'smem constant byte address 0x4 - core index']
  #allocation1 [shape = 'u32[144,128]{1,0:T(1,128)}', space=vmem, size = 0x12000, scoped, tag = 'internal scratch']
  #allocation2 [shape = 'f32[1]{0:T(128)S(6)}', space=smem, size = 0x200, scoped, tag = 'scoped memory for tpu_custom_call.1']
  %s0 = inlined_call_operand.<no memory space> [shape: f32[1], index: 0, kind: input, shape index: {}]
  %s1 = inlined_call_operand.vmem [shape: f32[8,32], index: 1, kind: input, shape index: {}]
  %s2 = inlined_call_operand.vmem [shape: f32[8,32], index: 2, kind: input, shape index: {}]
  %s3 = inlined_call_operand.vmem [shape: f32[32,16], index: 3, kind: input, shape index: {}]
  %s4 = inlined_call_operand.hbm [shape: f32[8,8], index: 4, kind: output, shape index: {0}]
  %s5 = inlined_call_operand.hbm [shape: f32[8,8], index: 5, kind: output, shape index: {1}]
  %s6 = inlined_call_operand.hbm [shape: f32[8,128], index: 6, kind: output, shape index: {2}]
  %7 = xla_tuple %s4, %s5, %s6
  %s8 = sld [smem:[#allocation0]]
  $region42: #{tpu_custom_call.1} parent=0
    _
  %s10 = ssub.s32 1, %s8
  %s11 = scalar_select 0, %s10, %s8
  %12 = sst [smem:[#allocation2]] %s0
  $region1: #{tpu_custom_call.1} parent=0
    #allocation3 [shape = 'u8[4096]{0}', space=vmem, size = 0x1000, scoped, tag = 'output window, operand 0, single buffered']
    #allocation4 [shape = 's32[1]{0}', space=sflag, size = 0x4, scoped, tag = 'scoped memory for tpu_custom_call.1']
    #allocation5 [shape = 'u8[4096]{0}', space=vmem, size = 0x1000, scoped, tag = 'output window, operand 1, single buffered']
    #allocation6 [shape = 's32[1]{0}', space=sflag, size = 0x4, scoped, tag = 'scoped memory for tpu_custom_call.1']
    #allocation7 [shape = 'u8[4096]{0}', space=vmem, size = 0x1000, scoped, tag = 'output window, operand 2, single buffered']
    %13 = vsyncpa [#allocation4], 0
    %14 = vsyncpa [#allocation6], 0
    // Predicated region
    $region2: #{tpu_custom_call.1} parent=1 // pred_check
      _
    $region3: #{tpu_custom_call.1} parent=1 // pred_check_branch
      %16 = sbr.rel (0) target = $region5
    $region4: #{tpu_custom_call.1} parent=1 // pred_region
      _
    $region5: #{tpu_custom_call.1} parent=1 // pred_fallthru
      _
    // Predicated region
    $region6: #{tpu_custom_call.1} parent=1 // pred_check
      _
    $region7: #{tpu_custom_call.1} parent=1 // pred_check_branch
      %18 = sbr.rel (0) target = $region9
    $region8: #{tpu_custom_call.1} parent=1 // pred_region
      _
    $region9: #{tpu_custom_call.1} parent=1 // pred_fallthru
      _
    // Predicated region
    $region10: #{tpu_custom_call.1} parent=1 // pred_check
      _
    $region11: #{tpu_custom_call.1} parent=1 // pred_check_branch
      %20 = sbr.rel (0) target = $region13
    $region12: #{tpu_custom_call.1} parent=1 // pred_region
      _
    $region13: #{tpu_custom_call.1} parent=1 // pred_fallthru
      _
    // Predicated region
    $region14: #{tpu_custom_call.1} parent=1 // pred_check
      _
    $region15: #{tpu_custom_call.1} parent=1 // pred_check_branch
      %22 = sbr.rel (0) target = $region17
    $region16: #{tpu_custom_call.1} parent=1 // pred_region
      _
    $region17: #{tpu_custom_call.1} parent=1 // pred_fallthru
      _
    %v23 = vld [vmem:[%s1] sm:$0xff]
    %v24 = vld [vmem:[%s2] sm:$0xff]
    %v25 = vld [vmem:[%s3] sm:$0xff]
    %v26 = vld [vmem:[%s3 + $0x8] sm:$0xff]
    %v27 = vld [vmem:[%s3 + $0x10] sm:$0xff]
    %v28 = vld [vmem:[%s3 + $0x18] sm:$0xff]
    %vm29 = vcmask 261120
    %v31 = vsel %vm29, %v23, 0
    %33 = vmatprep.subr.mxu0 0.0
    %34 = vmatpush1.msra.mxu0 0.0
    %35 = vmatprep.subr.mxu0 0.0
    %36 = vmatpush1.msra.mxu0 0.0
    %37 = vmatprep.subr.mxu0 0.0
    %38 = vmatpush1.msra.mxu0 0.0
    %39 = vmatprep.subr.mxu0 0.0
    %40 = vmatpush1.msra.mxu0 0.0
    %41 = vmatprep.subr.mxu0 0.0
    %42 = vmatpush1.msra.mxu0 0.0
    %43 = vmatprep.subr.mxu0 0.0
    %44 = vmatpush1.msra.mxu0 0.0
    %45 = vmatprep.subr.mxu0 0.0
    %46 = vmatpush1.msra.mxu0 0.0
    %47 = vmatprep.subr.mxu0 0.0
    %48 = vmatpush1.msra.mxu0 0.0
    %49 = vmatprep.subr.mxu0 0.0
    %50 = vmatpush1.msra.mxu0 0.0
    %51 = vmatprep.subr.mxu0 0.0
    %52 = vmatpush1.msra.mxu0 0.0
    %53 = vmatprep.subr.mxu0 0.0
    %54 = vmatpush1.msra.mxu0 0.0
    %55 = vmatprep.subr.mxu0 0.0
    %56 = vmatpush1.msra.mxu0 0.0
    %57 = vmatprep.subr.mxu0 0.0
    %58 = vmatpush1.msra.mxu0 %v28
    %59 = vmatprep.subr.mxu0 0.0
    %60 = vmatpush1.msra.mxu0 %v27
    %61 = vmatprep.subr.mxu0 0.0
    %62 = vmatpush1.msra.mxu0 %v26
    %63 = vmatprep.subr.mxu0 0.0
    %64 = vmatpush1.msra.mxu0 %v25
    %65 = vmatprep.subr.mxu0 0.0
    %66 = vmatpush2.msra.mxu0 0.0
    %67 = vmatprep.subr.mxu0 0.0
    %68 = vmatpush2.msra.mxu0 0.0
    %69 = vmatprep.subr.mxu0 0.0
    %70 = vmatpush2.msra.mxu0 0.0
    %71 = vmatprep.subr.mxu0 0.0
    %72 = vmatpush2.msra.mxu0 0.0
    %73 = vmatprep.subr.mxu0 0.0
    %74 = vmatpush2.msra.mxu0 0.0
    %75 = vmatprep.subr.mxu0 0.0
    %76 = vmatpush2.msra.mxu0 0.0
    %77 = vmatprep.subr.mxu0 0.0
    %78 = vmatpush2.msra.mxu0 0.0
    %79 = vmatprep.subr.mxu0 0.0
    %80 = vmatpush2.msra.mxu0 0.0
    %81 = vmatprep.subr.mxu0 0.0
    %82 = vmatpush2.msra.mxu0 0.0
    %83 = vmatprep.subr.mxu0 0.0
    %84 = vmatpush2.msra.mxu0 0.0
    %85 = vmatprep.subr.mxu0 0.0
    %86 = vmatpush2.msra.mxu0 0.0
    %87 = vmatprep.subr.mxu0 0.0
    %88 = vmatpush2.msra.mxu0 0.0
    %89 = vmatprep.subr.mxu0 0.0
    %90 = vmatpush2.msra.mxu0 0.0
    %91 = vmatprep.subr.mxu0 0.0
    %92 = vmatpush2.msra.mxu0 0.0
    %93 = vmatprep.subr.mxu0 0.0
    %94 = vmatpush2.msra.mxu0 0.0
    %95 = vmatprep.subr.mxu0 0.0
    %96 = vmatpush2.msra.mxu0 0.0
    %97 = vmatprep.mubr.f32.mxu0 0.0
    %98 = vmatmul.mubr.f32.gmra.mxu0 %v31
    %v99 = vpop.f32.mrf.mxu0
    %v100 = vadd.f32 0.0, %v99
    %v101 = vpop.f32.mrf.mxu0
    %102 = vdwg.mxu0
    %v104 = vsel %vm29, %v24, 0
    %106 = vmatprep.subr.mxu0 0.0
    %107 = vmatpush1.msra.mxu0 0.0
    %108 = vmatprep.subr.mxu0 0.0
    %109 = vmatpush1.msra.mxu0 0.0
    %110 = vmatprep.subr.mxu0 0.0
    %111 = vmatpush1.msra.mxu0 0.0
    %112 = vmatprep.subr.mxu0 0.0
    %113 = vmatpush1.msra.mxu0 0.0
    %114 = vmatprep.subr.mxu0 0.0
    %115 = vmatpush1.msra.mxu0 0.0
    %116 = vmatprep.subr.mxu0 0.0
    %117 = vmatpush1.msra.mxu0 0.0
    %118 = vmatprep.subr.mxu0 0.0
    %119 = vmatpush1.msra.mxu0 0.0
    %120 = vmatprep.subr.mxu0 0.0
    %121 = vmatpush1.msra.mxu0 0.0
    %122 = vmatprep.subr.mxu0 0.0
    %123 = vmatpush1.msra.mxu0 0.0
    %124 = vmatprep.subr.mxu0 0.0
    %125 = vmatpush1.msra.mxu0 0.0
    %126 = vmatprep.subr.mxu0 0.0
    %127 = vmatpush1.msra.mxu0 0.0
    %128 = vmatprep.subr.mxu0 0.0
    %129 = vmatpush1.msra.mxu0 0.0
    %130 = vmatprep.subr.mxu0 0.0
    %131 = vmatpush1.msra.mxu0 %v28
    %132 = vmatprep.subr.mxu0 0.0
    %133 = vmatpush1.msra.mxu0 %v27
    %134 = vmatprep.subr.mxu0 0.0
    %135 = vmatpush1.msra.mxu0 %v26
    %136 = vmatprep.subr.mxu0 0.0
    %137 = vmatpush1.msra.mxu0 %v25
    %138 = vmatprep.subr.mxu0 0.0
    %139 = vmatpush2.msra.mxu0 0.0
    %140 = vmatprep.subr.mxu0 0.0
    %141 = vmatpush2.msra.mxu0 0.0
    %142 = vmatprep.subr.mxu0 0.0
    %143 = vmatpush2.msra.mxu0 0.0
    %144 = vmatprep.subr.mxu0 0.0
    %145 = vmatpush2.msra.mxu0 0.0
    %146 = vmatprep.subr.mxu0 0.0
    %147 = vmatpush2.msra.mxu0 0.0
    %148 = vmatprep.subr.mxu0 0.0
    %149 = vmatpush2.msra.mxu0 0.0
    %150 = vmatprep.subr.mxu0 0.0
    %151 = vmatpush2.msra.mxu0 0.0
    %152 = vmatprep.subr.mxu0 0.0
    %153 = vmatpush2.msra.mxu0 0.0
    %154 = vmatprep.subr.mxu0 0.0
    %155 = vmatpush2.msra.mxu0 0.0
    %156 = vmatprep.subr.mxu0 0.0
    %157 = vmatpush2.msra.mxu0 0.0
    %158 = vmatprep.subr.mxu0 0.0
    %159 = vmatpush2.msra.mxu0 0.0
    %160 = vmatprep.subr.mxu0 0.0
    %161 = vmatpush2.msra.mxu0 0.0
    %162 = vmatprep.subr.mxu0 0.0
    %163 = vmatpush2.msra.mxu0 0.0
    %164 = vmatprep.subr.mxu0 0.0
    %165 = vmatpush2.msra.mxu0 0.0
    %166 = vmatprep.subr.mxu0 0.0
    %167 = vmatpush2.msra.mxu0 0.0
    %168 = vmatprep.subr.mxu0 0.0
    %169 = vmatpush2.msra.mxu0 0.0
    %170 = vmatprep.mubr.f32.mxu0 0.0
    %171 = vmatmul.mubr.f32.gmra.mxu0 %v104
    %v172 = vpop.f32.mrf.mxu0
    %v173 = vadd.f32 0.0, %v172
    %v174 = vpop.f32.mrf.mxu0
    %175 = vdwg.mxu0
    %v176 = vmul.f32 %v23, %v23
    %v177 = vsel %vm29, %v176, 0.0
    %178 = vadd.xlane.f32.xlu0 %v177
    %v179 = vpop.xlane.xlu0 %178
    %v180 = vmul.f32 %v100, %v100
    %vm181 = vcmask 130048
    %v182 = vsel %vm181, %v180, 0.0
    %183 = vadd.xlane.f32.xlu0 %v182
    %v184 = vpop.xlane.xlu0 %183
    %v185 = vmul.f32 %v24, %v24
    %v187 = vsel %vm29, 1.0, 0
    %v190 = vsel %vm29, %v185, 0
    %192 = vmatprep.subr.mxu0 0.0
    %193 = vmatpush1.xpose.msra.mxu0 0.0
    %194 = vmatprep.subr.mxu0 0.0
    %195 = vmatpush1.xpose.msra.mxu0 0.0
    %196 = vmatprep.subr.mxu0 0.0
    %197 = vmatpush1.xpose.msra.mxu0 0.0
    %198 = vmatprep.subr.mxu0 0.0
    %199 = vmatpush1.xpose.msra.mxu0 0.0
    %200 = vmatprep.subr.mxu0 0.0
    %201 = vmatpush1.xpose.msra.mxu0 0.0
    %202 = vmatprep.subr.mxu0 0.0
    %203 = vmatpush1.xpose.msra.mxu0 0.0
    %204 = vmatprep.subr.mxu0 0.0
    %205 = vmatpush1.xpose.msra.mxu0 0.0
    %206 = vmatprep.subr.mxu0 0.0
    %207 = vmatpush1.xpose.msra.mxu0 0.0
    %208 = vmatprep.subr.mxu0 0.0
    %209 = vmatpush1.xpose.msra.mxu0 0.0
    %210 = vmatprep.subr.mxu0 0.0
    %211 = vmatpush1.xpose.msra.mxu0 0.0
    %212 = vmatprep.subr.mxu0 0.0
    %213 = vmatpush1.xpose.msra.mxu0 0.0
    %214 = vmatprep.subr.mxu0 0.0
    %215 = vmatpush1.xpose.msra.mxu0 0.0
    %216 = vmatprep.subr.mxu0 0.0
    %217 = vmatpush1.xpose.msra.mxu0 0.0
    %218 = vmatprep.subr.mxu0 0.0
    %219 = vmatpush1.xpose.msra.mxu0 0.0
    %220 = vmatprep.subr.mxu0 0.0
    %221 = vmatpush1.xpose.msra.mxu0 0.0
    %222 = vmatprep.subr.mxu0 0.0
    %223 = vmatpush1.xpose.msra.mxu0 %v190
    %224 = vmatprep.subr.mxu0 0.0
    %225 = vmatpush2.xpose.msra.mxu0 0.0
    %226 = vmatprep.subr.mxu0 0.0
    %227 = vmatpush2.xpose.msra.mxu0 0.0
    %228 = vmatprep.subr.mxu0 0.0
    %229 = vmatpush2.xpose.msra.mxu0 0.0
    %230 = vmatprep.subr.mxu0 0.0
    %231 = vmatpush2.xpose.msra.mxu0 0.0
    %232 = vmatprep.subr.mxu0 0.0
    %233 = vmatpush2.xpose.msra.mxu0 0.0
    %234 = vmatprep.subr.mxu0 0.0
    %235 = vmatpush2.xpose.msra.mxu0 0.0
    %236 = vmatprep.subr.mxu0 0.0
    %237 = vmatpush2.xpose.msra.mxu0 0.0
    %238 = vmatprep.subr.mxu0 0.0
    %239 = vmatpush2.xpose.msra.mxu0 0.0
    %240 = vmatprep.subr.mxu0 0.0
    %241 = vmatpush2.xpose.msra.mxu0 0.0
    %242 = vmatprep.subr.mxu0 0.0
    %243 = vmatpush2.xpose.msra.mxu0 0.0
    %244 = vmatprep.subr.mxu0 0.0
    %245 = vmatpush2.xpose.msra.mxu0 0.0
    %246 = vmatprep.subr.mxu0 0.0
    %247 = vmatpush2.xpose.msra.mxu0 0.0
    %248 = vmatprep.subr.mxu0 0.0
    %249 = vmatpush2.xpose.msra.mxu0 0.0
    %250 = vmatprep.subr.mxu0 0.0
    %251 = vmatpush2.xpose.msra.mxu0 0.0
    %252 = vmatprep.subr.mxu0 0.0
    %253 = vmatpush2.xpose.msra.mxu0 0.0
    %254 = vmatprep.subr.mxu0 0.0
    %255 = vmatpush2.xpose.msra.mxu0 0.0
    %256 = vmatprep.mubr.f32.mxu0 0.0
    %257 = vmatmul.mubr.f32.gmra.mxu0 %v187
    %v258 = vpop.f32.mrf.mxu0
    %v259 = vadd.f32 0.0, %v258
    %v260 = vpop.f32.mrf.mxu0
    %261 = vdwg.mxu0
    %v262 = vmul.f32 %v173, %v173
    %v263 = vsel %vm181, 1.0, 0
    %v266 = vsel %vm181, %v262, 0
    %268 = vmatprep.subr.mxu0 0.0
    %269 = vmatpush1.xpose.msra.mxu0 0.0
    %270 = vmatprep.subr.mxu0 0.0
    %271 = vmatpush1.xpose.msra.mxu0 0.0
    %272 = vmatprep.subr.mxu0 0.0
    %273 = vmatpush1.xpose.msra.mxu0 0.0
    %274 = vmatprep.subr.mxu0 0.0
    %275 = vmatpush1.xpose.msra.mxu0 0.0
    %276 = vmatprep.subr.mxu0 0.0
    %277 = vmatpush1.xpose.msra.mxu0 0.0
    %278 = vmatprep.subr.mxu0 0.0
    %279 = vmatpush1.xpose.msra.mxu0 0.0
    %280 = vmatprep.subr.mxu0 0.0
    %281 = vmatpush1.xpose.msra.mxu0 0.0
    %282 = vmatprep.subr.mxu0 0.0
    %283 = vmatpush1.xpose.msra.mxu0 0.0
    %284 = vmatprep.subr.mxu0 0.0
    %285 = vmatpush1.xpose.msra.mxu0 0.0
    %286 = vmatprep.subr.mxu0 0.0
    %287 = vmatpush1.xpose.msra.mxu0 0.0
    %288 = vmatprep.subr.mxu0 0.0
    %289 = vmatpush1.xpose.msra.mxu0 0.0
    %290 = vmatprep.subr.mxu0 0.0
    %291 = vmatpush1.xpose.msra.mxu0 0.0
    %292 = vmatprep.subr.mxu0 0.0
    %293 = vmatpush1.xpose.msra.mxu0 0.0
    %294 = vmatprep.subr.mxu0 0.0
    %295 = vmatpush1.xpose.msra.mxu0 0.0
    %296 = vmatprep.subr.mxu0 0.0
    %297 = vmatpush1.xpose.msra.mxu0 0.0
    %298 = vmatprep.subr.mxu0 0.0
    %299 = vmatpush1.xpose.msra.mxu0 %v266
    %300 = vmatprep.subr.mxu0 0.0
    %301 = vmatpush2.xpose.msra.mxu0 0.0
    %302 = vmatprep.subr.mxu0 0.0
    %303 = vmatpush2.xpose.msra.mxu0 0.0
    %304 = vmatprep.subr.mxu0 0.0
    %305 = vmatpush2.xpose.msra.mxu0 0.0
    %306 = vmatprep.subr.mxu0 0.0
    %307 = vmatpush2.xpose.msra.mxu0 0.0
    %308 = vmatprep.subr.mxu0 0.0
    %309 = vmatpush2.xpose.msra.mxu0 0.0
    %310 = vmatprep.subr.mxu0 0.0
    %311 = vmatpush2.xpose.msra.mxu0 0.0
    %312 = vmatprep.subr.mxu0 0.0
    %313 = vmatpush2.xpose.msra.mxu0 0.0
    %314 = vmatprep.subr.mxu0 0.0
    %315 = vmatpush2.xpose.msra.mxu0 0.0
    %316 = vmatprep.subr.mxu0 0.0
    %317 = vmatpush2.xpose.msra.mxu0 0.0
    %318 = vmatprep.subr.mxu0 0.0
    %319 = vmatpush2.xpose.msra.mxu0 0.0
    %320 = vmatprep.subr.mxu0 0.0
    %321 = vmatpush2.xpose.msra.mxu0 0.0
    %322 = vmatprep.subr.mxu0 0.0
    %323 = vmatpush2.xpose.msra.mxu0 0.0
    %324 = vmatprep.subr.mxu0 0.0
    %325 = vmatpush2.xpose.msra.mxu0 0.0
    %326 = vmatprep.subr.mxu0 0.0
    %327 = vmatpush2.xpose.msra.mxu0 0.0
    %328 = vmatprep.subr.mxu0 0.0
    %329 = vmatpush2.xpose.msra.mxu0 0.0
    %330 = vmatprep.subr.mxu0 0.0
    %331 = vmatpush2.xpose.msra.mxu0 0.0
    %332 = vmatprep.mubr.f32.mxu0 0.0
    %333 = vmatmul.mubr.f32.gmra.mxu0 %v263
    %v334 = vpop.f32.mrf.mxu0
    %v335 = vadd.f32 0.0, %v334
    %v336 = vpop.f32.mrf.mxu0
    %337 = vdwg.mxu0
    %338 = vmatprep.subr.mxu0 0.0
    %339 = vmatpush1.xpose.msra.mxu0 0.0
    %340 = vmatprep.subr.mxu0 0.0
    %341 = vmatpush1.xpose.msra.mxu0 0.0
    %342 = vmatprep.subr.mxu0 0.0
    %343 = vmatpush1.xpose.msra.mxu0 0.0
    %344 = vmatprep.subr.mxu0 0.0
    %345 = vmatpush1.xpose.msra.mxu0 0.0
    %346 = vmatprep.subr.mxu0 0.0
    %347 = vmatpush1.xpose.msra.mxu0 0.0
    %348 = vmatprep.subr.mxu0 0.0
    %349 = vmatpush1.xpose.msra.mxu0 0.0
    %350 = vmatprep.subr.mxu0 0.0
    %351 = vmatpush1.xpose.msra.mxu0 0.0
    %352 = vmatprep.subr.mxu0 0.0
    %353 = vmatpush1.xpose.msra.mxu0 0.0
    %354 = vmatprep.subr.mxu0 0.0
    %355 = vmatpush1.xpose.msra.mxu0 0.0
    %356 = vmatprep.subr.mxu0 0.0
    %357 = vmatpush1.xpose.msra.mxu0 0.0
    %358 = vmatprep.subr.mxu0 0.0
    %359 = vmatpush1.xpose.msra.mxu0 0.0
    %360 = vmatprep.subr.mxu0 0.0
    %361 = vmatpush1.xpose.msra.mxu0 0.0
    %362 = vmatprep.subr.mxu0 0.0
    %363 = vmatpush1.xpose.msra.mxu0 0.0
    %364 = vmatprep.subr.mxu0 0.0
    %365 = vmatpush1.xpose.msra.mxu0 0.0
    %366 = vmatprep.subr.mxu0 0.0
    %367 = vmatpush1.xpose.msra.mxu0 0.0
    %368 = vmatprep.subr.mxu0 0.0
    %369 = vmatpush1.xpose.msra.mxu0 %v104
    %370 = vmatprep.subr.mxu0 0.0
    %371 = vmatpush2.xpose.msra.mxu0 0.0
    %372 = vmatprep.subr.mxu0 0.0
    %373 = vmatpush2.xpose.msra.mxu0 0.0
    %374 = vmatprep.subr.mxu0 0.0
    %375 = vmatpush2.xpose.msra.mxu0 0.0
    %376 = vmatprep.subr.mxu0 0.0
    %377 = vmatpush2.xpose.msra.mxu0 0.0
    %378 = vmatprep.subr.mxu0 0.0
    %379 = vmatpush2.xpose.msra.mxu0 0.0
    %380 = vmatprep.subr.mxu0 0.0
    %381 = vmatpush2.xpose.msra.mxu0 0.0
    %382 = vmatprep.subr.mxu0 0.0
    %383 = vmatpush2.xpose.msra.mxu0 0.0
    %384 = vmatprep.subr.mxu0 0.0
    %385 = vmatpush2.xpose.msra.mxu0 0.0
    %386 = vmatprep.subr.mxu0 0.0
    %387 = vmatpush2.xpose.msra.mxu0 0.0
    %388 = vmatprep.subr.mxu0 0.0
    %389 = vmatpush2.xpose.msra.mxu0 0.0
    %390 = vmatprep.subr.mxu0 0.0
    %391 = vmatpush2.xpose.msra.mxu0 0.0
    %392 = vmatprep.subr.mxu0 0.0
    %393 = vmatpush2.xpose.msra.mxu0 0.0
    %394 = vmatprep.subr.mxu0 0.0
    %395 = vmatpush2.xpose.msra.mxu0 0.0
    %396 = vmatprep.subr.mxu0 0.0
    %397 = vmatpush2.xpose.msra.mxu0 0.0
    %398 = vmatprep.subr.mxu0 0.0
    %399 = vmatpush2.xpose.msra.mxu0 0.0
    %400 = vmatprep.subr.mxu0 0.0
    %401 = vmatpush2.xpose.msra.mxu0 0.0
    %402 = vmatprep.mubr.f32.mxu0 0.0
    %403 = vmatmul.mubr.f32.gmra.mxu0 %v31
    %v404 = vpop.f32.mrf.mxu0
    %v405 = vadd.f32 0.0, %v404
    %v406 = vpop.f32.mrf.mxu0
    %407 = vdwg.mxu0
    %v409 = vsel %vm181, %v100, 0
    %v412 = vsel %vm181, %v173, 0
    %414 = vmatprep.subr.mxu0 0.0
    %415 = vmatpush1.xpose.msra.mxu0 0.0
    %416 = vmatprep.subr.mxu0 0.0
    %417 = vmatpush1.xpose.msra.mxu0 0.0
    %418 = vmatprep.subr.mxu0 0.0
    %419 = vmatpush1.xpose.msra.mxu0 0.0
    %420 = vmatprep.subr.mxu0 0.0
    %421 = vmatpush1.xpose.msra.mxu0 0.0
    %422 = vmatprep.subr.mxu0 0.0
    %423 = vmatpush1.xpose.msra.mxu0 0.0
    %424 = vmatprep.subr.mxu0 0.0
    %425 = vmatpush1.xpose.msra.mxu0 0.0
    %426 = vmatprep.subr.mxu0 0.0
    %427 = vmatpush1.xpose.msra.mxu0 0.0
    %428 = vmatprep.subr.mxu0 0.0
    %429 = vmatpush1.xpose.msra.mxu0 0.0
    %430 = vmatprep.subr.mxu0 0.0
    %431 = vmatpush1.xpose.msra.mxu0 0.0
    %432 = vmatprep.subr.mxu0 0.0
    %433 = vmatpush1.xpose.msra.mxu0 0.0
    %434 = vmatprep.subr.mxu0 0.0
    %435 = vmatpush1.xpose.msra.mxu0 0.0
    %436 = vmatprep.subr.mxu0 0.0
    %437 = vmatpush1.xpose.msra.mxu0 0.0
    %438 = vmatprep.subr.mxu0 0.0
    %439 = vmatpush1.xpose.msra.mxu0 0.0
    %440 = vmatprep.subr.mxu0 0.0
    %441 = vmatpush1.xpose.msra.mxu0 0.0
    %442 = vmatprep.subr.mxu0 0.0
    %443 = vmatpush1.xpose.msra.mxu0 0.0
    %444 = vmatprep.subr.mxu0 0.0
    %445 = vmatpush1.xpose.msra.mxu0 %v412
    %446 = vmatprep.subr.mxu0 0.0
    %447 = vmatpush2.xpose.msra.mxu0 0.0
    %448 = vmatprep.subr.mxu0 0.0
    %449 = vmatpush2.xpose.msra.mxu0 0.0
    %450 = vmatprep.subr.mxu0 0.0
    %451 = vmatpush2.xpose.msra.mxu0 0.0
    %452 = vmatprep.subr.mxu0 0.0
    %453 = vmatpush2.xpose.msra.mxu0 0.0
    %454 = vmatprep.subr.mxu0 0.0
    %455 = vmatpush2.xpose.msra.mxu0 0.0
    %456 = vmatprep.subr.mxu0 0.0
    %457 = vmatpush2.xpose.msra.mxu0 0.0
    %458 = vmatprep.subr.mxu0 0.0
    %459 = vmatpush2.xpose.msra.mxu0 0.0
    %460 = vmatprep.subr.mxu0 0.0
    %461 = vmatpush2.xpose.msra.mxu0 0.0
    %462 = vmatprep.subr.mxu0 0.0
    %463 = vmatpush2.xpose.msra.mxu0 0.0
    %464 = vmatprep.subr.mxu0 0.0
    %465 = vmatpush2.xpose.msra.mxu0 0.0
    %466 = vmatprep.subr.mxu0 0.0
    %467 = vmatpush2.xpose.msra.mxu0 0.0
    %468 = vmatprep.subr.mxu0 0.0
    %469 = vmatpush2.xpose.msra.mxu0 0.0
    %470 = vmatprep.subr.mxu0 0.0
    %471 = vmatpush2.xpose.msra.mxu0 0.0
    %472 = vmatprep.subr.mxu0 0.0
    %473 = vmatpush2.xpose.msra.mxu0 0.0
    %474 = vmatprep.subr.mxu0 0.0
    %475 = vmatpush2.xpose.msra.mxu0 0.0
    %476 = vmatprep.subr.mxu0 0.0
    %477 = vmatpush2.xpose.msra.mxu0 0.0
    %478 = vmatprep.mubr.f32.mxu0 0.0
    %479 = vmatmul.mubr.f32.gmra.mxu0 %v409
    %v480 = vpop.f32.mrf.mxu0
    %v481 = vadd.f32 0.0, %v480
    %v482 = vpop.f32.mrf.mxu0
    %483 = vdwg.mxu0
    %v484 = vlaneseq
    %v485 = vshrl.u32 %v484, 7
    %v486 = vsub.s32 0, %v485
    %v487 = vrot.slane %v259, %v486
    %v488 = vadd.f32 %v179, %v487
    %v489 = vmul.f32 %v405, 2.0
    %v490 = vsub.f32 %v488, %v489
    %v491 = vmax.f32 %v490, 0.0
    %v492 = vrsqrt.pop %v491
    %v493 = vmul.f32 %v491, %v492
    %vm494 = vcmp.eq.f32.partialorder %v491, inf
    %v495 = vsel %vm494, %v491, %v493
    %vm496 = vcmp.eq.f32.partialorder %v491, 0.0
    %v497 = vand.u32 %v491, 2147483648
    %v498 = vsel %vm496, %v497, %v495
    %v499 = vlaneseq
    %v500 = vshrl.u32 %v499, 7
    %v501 = vsub.s32 0, %v500
    %v502 = vrot.slane %v335, %v501
    %v503 = vadd.f32 %v184, %v502
    %v504 = vmul.f32 %v481, 2.0
    %v505 = vsub.f32 %v503, %v504
    %v506 = vmax.f32 %v505, 0.0
    %v507 = vrsqrt.pop %v506
    %v508 = vmul.f32 %v506, %v507
    %vm509 = vcmp.eq.f32.partialorder %v506, inf
    %v510 = vsel %vm509, %v506, %v508
    %vm511 = vcmp.eq.f32.partialorder %v506, 0.0
    %v512 = vand.u32 %v506, 2147483648
    %v513 = vsel %vm511, %v512, %v510
    %vm514 = vcmask 64512
    %515 = vst.msk [vmem:[#allocation3] sm:$0xff] %vm514, %v513
    %516 = vst.msk [vmem:[#allocation5] sm:$0xff] %vm514, %v498
    %s517 = smul.u32 0, 8
    %v518 = vlaneseq
    %v519 = vshrl.u32 %v518, 7
    %v520 = vstv %s517
    %v521 = vadd.s32 %v520, %v519
    %s522 = smul.u32 0, 8
    %v523 = vlaneseq
    %v524 = vand.u32 %v523, 127
    %v525 = vstv %s522
    %v526 = vadd.s32 %v525, %v524
    %vm527 = vcmp.lt.s32.totalorder %v521, %v526
    %vm528 = vcmp.lt.s32.totalorder %v526, 8
    %vm529 = vmand %vm527, %vm528
    %s530 = sld [smem:[#allocation2]]
    %v531 = vstv %s530
    %v532 = vmul.f32 %v531, %v513
    %v533 = vsub.f32 %v532, %v498
    %v534 = vmul.f32 %v533, %v533
    %v535 = vsel %vm529, %v534, 0.0
    %v536 = vsel %vm514, %v535, 0.0
    %537 = vadd.xlane.f32.xlu0 %v536
    %v538 = vpop.xlane.xlu0 %537
    %v539 = vrot.slane %v538, 4
    %v540 = vadd.f32 %v538, %v539
    %v541 = vrot.slane %v540, 2
    %v542 = vadd.f32 %v540, %v541
    %v543 = vrot.slane %v542, 1
    %v544 = vadd.f32 %v542, %v543
    %s545 = vtos %v544
    %vm546 = vcmp.eq.s32.totalorder %v519, 0
    %vm547 = vcmp.eq.s32.totalorder %v524, 0
    %vm548 = vmand %vm546, %vm547
    %v549 = vstv %s545
    %v550 = vsel %vm548, %v549, 0.0
    %551 = vst [vmem:[#allocation7] sm:$0xff] %v550
    // Predicated region
    $region18: #{tpu_custom_call.1} parent=1 // pred_check
      _
    $region19: #{tpu_custom_call.1} parent=1 // pred_check_branch
      %553 = sbr.rel (0) target = $region21
    $region20: #{tpu_custom_call.1} parent=1 // pred_region
      %s555 = ssub.s32 128, 128
      %556 = vsyncadd [#allocation4], %s555
      %s558 = sshll.u32 [#allocation3], 4
      %s559 = int_to_ptr.vmem [resolvable:$true] %s558
      %561 = dma.vmem_to_hbm [thread:$0]  %s559, 128, %s4, [#allocation4]
    $region21: #{tpu_custom_call.1} parent=1 // pred_fallthru
      _
    // Predicated region
    $region22: #{tpu_custom_call.1} parent=1 // pred_check
      _
    $region23: #{tpu_custom_call.1} parent=1 // pred_check_branch
      %563 = sbr.rel (0) target = $region25
    $region24: #{tpu_custom_call.1} parent=1 // pred_region
      %s565 = ssub.s32 128, 128
      %566 = vsyncadd [#allocation6], %s565
      %s568 = sshll.u32 [#allocation5], 4
      %s569 = int_to_ptr.vmem [resolvable:$true] %s568
      %571 = dma.vmem_to_hbm [thread:$0]  %s569, 128, %s5, [#allocation6]
    $region25: #{tpu_custom_call.1} parent=1 // pred_fallthru
      _
    // Predicated region
    $region26: #{tpu_custom_call.1} parent=1 // pred_check
      _
    $region27: #{tpu_custom_call.1} parent=1 // pred_check_branch
      %573 = sbr.rel (0) target = $region29
    $region28: #{tpu_custom_call.1} parent=1 // pred_region
      %s575 = ssub.s32 128, 128
      %576 = vsyncadd [#allocation6], %s575
      %s578 = sshll.u32 [#allocation7], 4
      %s579 = int_to_ptr.vmem [resolvable:$true] %s578
      %581 = dma.vmem_to_hbm [thread:$0]  %s579, 128, %s6, [#allocation6]
    $region29: #{tpu_custom_call.1} parent=1 // pred_fallthru
      _
    // Predicated region
    $region30: #{tpu_custom_call.1} parent=1 // pred_check
      _
    $region31: #{tpu_custom_call.1} parent=1 // pred_check_branch
      %583 = sbr.rel (0) target = $region33
    $region32: #{tpu_custom_call.1} parent=1 // pred_region
      %584 = dma.done [#allocation4], 128
    $region33: #{tpu_custom_call.1} parent=1 // pred_fallthru
      _
    // Predicated region
    $region34: #{tpu_custom_call.1} parent=1 // pred_check
      _
    $region35: #{tpu_custom_call.1} parent=1 // pred_check_branch
      %586 = sbr.rel (0) target = $region37
    $region36: #{tpu_custom_call.1} parent=1 // pred_region
      %587 = dma.done [#allocation6], 128
    $region37: #{tpu_custom_call.1} parent=1 // pred_fallthru
      _
    // Predicated region
    $region38: #{tpu_custom_call.1} parent=1 // pred_check
      _
    $region39: #{tpu_custom_call.1} parent=1 // pred_check_branch
      %589 = sbr.rel (0) target = $region41
    $region40: #{tpu_custom_call.1} parent=1 // pred_region
      %590 = dma.done [#allocation6], 128
    $region41: #{tpu_custom_call.1} parent=1 // pred_fallthru
      _
    %591 = vsyncpa [#allocation4], 1
    %592 = vsyncpa [#allocation6], 1

</llo_original>
